<compile_context>
chip_gen: v5e
topology: v5e:2x2
jax: 0.10.0
libtpu: 0.0.40
codegen_flags: <defaults>
</compile_context>

<pallas_src>
import functools

import jax
import jax.numpy as jnp
from jax.experimental import pallas as pl
from jax.experimental.pallas import tpu as pltpu

HIDDEN = 128   # fixed by the module (layer_one has 128 output features)
LANE = 128     # TPU lane width / MXU column granularity
SUBLANE = 8    # f32 sublane granularity


def _round_up(x, m):
    return (x + m - 1) // m * m


def mlp_kernel(x_ref, w1_ref, b1_ref, w2_ref, b2_ref, o_ref):
    # Layer 1: x @ W1 + b1, ReLU   (MXU matmul + VPU epilogue, all f32)
    h = jnp.dot(x_ref[...], w1_ref[...], preferred_element_type=jnp.float32)
    h = jnp.maximum(h + b1_ref[...], 0.0)          # b1 is (1, HIDDEN), broadcasts
    # Layer 2: h @ W2 + b2  (lane-dense N = padded multiple of 128)
    out = jnp.dot(h, w2_ref[...], preferred_element_type=jnp.float32)
    o_ref[...] = (out + b2_ref[...]).astype(o_ref.dtype)


@functools.partial(jax.jit, static_argnames=())
def neuralnet_forward(x, w1, b1, w2, b2):
    """Forward pass of NeuralNet.

    x : (N, in_size)
    w1: (128, in_size), b1: (128,)     -- nn.Linear layout (out_features, in_features)
    w2: (out_size, 128), b2: (out_size,)
    returns (N, out_size)
    """
    n, in_size = x.shape
    out_size = w2.shape[0]

    # ---- padding to hardware-friendly shapes (zeros: no effect on matmul) ----
    in_pad = _round_up(in_size, LANE)          # K of first matmul -> multiple of 128
    out_pad = _round_up(out_size, LANE)        # lane-dense output -> multiple of 128

    # Row tile: multiple of 8 (f32 sublane), capped at 256 (MXU M sweet spot on
    # v6e/v7x, 2x128 granules on v5e); shrink if x double-buffer would be large.
    n_pad8 = _round_up(n, SUBLANE)
    tm = 256
    while tm > SUBLANE and (tm >= 2 * n_pad8 or 2 * tm * in_pad * 4 > (8 << 20)):
        tm //= 2
    n_pad = _round_up(n, tm)
    grid = (n_pad // tm,)

    # ---- pre-transpose / pad parameters (cheap XLA ops outside the kernel) ----
    x_p = jnp.pad(x, ((0, n_pad - n), (0, in_pad - in_size)))
    w1_t = jnp.pad(w1.T, ((0, in_pad - in_size), (0, 0)))            # (in_pad, 128)
    w2_t = jnp.pad(w2.T, ((0, 0), (0, out_pad - out_size)))          # (128, out_pad)
    b1_2d = b1.reshape(1, HIDDEN)
    b2_2d = jnp.pad(b2.reshape(1, out_size), ((0, 0), (0, out_pad - out_size)))

    # ---- VMEM budget: double-buffered x/out blocks + resident weights ----
    vmem_bytes = (
        2 * tm * in_pad * 4            # x blocks (double-buffered)
        + 2 * tm * out_pad * 4         # out blocks (double-buffered)
        + 2 * (in_pad * HIDDEN + HIDDEN + HIDDEN * out_pad + out_pad) * 4
    )
    vmem_limit = int(min(max(2 * vmem_bytes, 16 << 20), 48 << 20))

    resident = lambda shape: pl.BlockSpec(shape, lambda i: (0, 0))

    out_padded = pl.pallas_call(
        mlp_kernel,
        out_shape=jax.ShapeDtypeStruct((n_pad, out_pad), x.dtype),
        grid=grid,
        in_specs=[
            pl.BlockSpec((tm, in_pad), lambda i: (i, 0)),   # x: tiled over batch
            resident((in_pad, HIDDEN)),                     # W1 resident in VMEM
            resident((1, HIDDEN)),                          # b1
            resident((HIDDEN, out_pad)),                    # W2
            resident((1, out_pad)),                         # b2
        ],
        out_specs=pl.BlockSpec((tm, out_pad), lambda i: (i, 0)),
        compiler_params=pltpu.CompilerParams(
            dimension_semantics=("parallel",),              # megacore-shardable on v7x
            vmem_limit_bytes=vmem_limit,
        ),
    )(x_p, w1_t, b1_2d, w2_t, b2_2d)

    # Slice away batch and lane padding.
    return out_padded[:n, :out_size]


def init_params(key, in_size, out_size):
    """Deterministic init mimicking nn.Linear default (uniform ±1/sqrt(fan_in))."""
    k1, k2, k3, k4 = jax.random.split(key, 4)
    bound1 = 1.0 / jnp.sqrt(in_size)
    bound2 = 1.0 / jnp.sqrt(HIDDEN)
    w1 = jax.random.uniform(k1, (HIDDEN, in_size), jnp.float32, -bound1, bound1)
    b1 = jax.random.uniform(k2, (HIDDEN,), jnp.float32, -bound1, bound1)
    w2 = jax.random.uniform(k3, (out_size, HIDDEN), jnp.float32, -bound2, bound2)
    b2 = jax.random.uniform(k4, (out_size,), jnp.float32, -bound2, bound2)
    return w1, b1, w2, b2


if __name__ == "__main__":
    N, IN_SIZE, OUT_SIZE = 8, 32, 4

    key = jax.random.PRNGKey(0)
    kx, kp = jax.random.split(key)
    x = jax.random.normal(kx, (N, IN_SIZE), jnp.float32)
    w1, b1, w2, b2 = init_params(kp, IN_SIZE, OUT_SIZE)

    y = neuralnet_forward(x, w1, b1, w2, b2)
    y = jax.block_until_ready(y)

    # Pure-JAX reference check of forward-pass semantics
    h_ref = jnp.maximum(x @ w1.T + b1, 0.0)
    y_ref = h_ref @ w2.T + b2
    assert y.shape == (N, OUT_SIZE)
    assert jnp.allclose(y, y_ref, atol=1e-5, rtol=1e-5)

    # Also exercise a larger, non-multiple batch to cover the tiled/padded path.
    N2 = 1000
    x2 = jax.random.normal(jax.random.PRNGKey(1), (N2, IN_SIZE), jnp.float32)
    y2 = jax.block_until_ready(neuralnet_forward(x2, w1, b1, w2, b2))
    y2_ref = jnp.maximum(x2 @ w1.T + b1, 0.0) @ w2.T + b2
    assert y2.shape == (N2, OUT_SIZE)
    assert jnp.allclose(y2, y2_ref, atol=1e-4, rtol=1e-4)

    print("KERNEL_OK")
</pallas_src>

<mosaic_0001>
module attributes {stable_mosaic.version = 11 : i64} {
  func.func @mlp_kernel(%arg0: i32, %arg1: memref<8x128xf32, #tpu.memory_space<vmem>>, %arg2: memref<128x128xf32, #tpu.memory_space<vmem>>, %arg3: memref<1x128xf32, #tpu.memory_space<vmem>>, %arg4: memref<128x128xf32, #tpu.memory_space<vmem>>, %arg5: memref<1x128xf32, #tpu.memory_space<vmem>>, %arg6: memref<8x128xf32, #tpu.memory_space<vmem>>) attributes {dimension_semantics = [#tpu.dimension_semantics<parallel>], iteration_bounds = array<i64: 1>, scalar_prefetch = 0 : i64, scratch_operands = 0 : i64, tpu.core_type = #tpu.core_type<tc>, window_params = [{transform_indices = @transform_0, window_bounds = array<i64: 8, 128>}, {pipeline_mode = #tpu.pipeline_mode<synchronous>, transform_indices = @transform_1, window_bounds = array<i64: 128, 128>}, {pipeline_mode = #tpu.pipeline_mode<synchronous>, transform_indices = @transform_2, window_bounds = array<i64: 1, 128>}, {pipeline_mode = #tpu.pipeline_mode<synchronous>, transform_indices = @transform_3, window_bounds = array<i64: 128, 128>}, {pipeline_mode = #tpu.pipeline_mode<synchronous>, transform_indices = @transform_4, window_bounds = array<i64: 1, 128>}, {transform_indices = @transform_5, window_bounds = array<i64: 8, 128>}]} {
    %c0 = arith.constant 0 : index
    %c0_0 = arith.constant 0 : index
    %0 = vector.load %arg1[%c0, %c0_0] : memref<8x128xf32, #tpu.memory_space<vmem>>, vector<8x128xf32>
    %c0_1 = arith.constant 0 : index
    %c0_2 = arith.constant 0 : index
    %1 = vector.load %arg2[%c0_1, %c0_2] : memref<128x128xf32, #tpu.memory_space<vmem>>, vector<128x128xf32>
    %cst = arith.constant dense<0.000000e+00> : vector<8x128xf32>
    %2 = tpu.matmul %0, %1, %cst {dimension_numbers = #tpu.dot_dimension_numbers<[1], [0], [0], [1], [0, 0, 1, 1], [], []>} : vector<8x128xf32>, vector<128x128xf32>, vector<8x128xf32> -> vector<8x128xf32>
    %c0_3 = arith.constant 0 : index
    %c0_4 = arith.constant 0 : index
    %3 = vector.load %arg3[%c0_3, %c0_4] : memref<1x128xf32, #tpu.memory_space<vmem>>, vector<1x128xf32>
    %4 = vector.broadcast %3 : vector<1x128xf32> to vector<8x128xf32>
    %5 = arith.addf %2, %4 : vector<8x128xf32>
    %cst_5 = arith.constant 0.000000e+00 : f32
    %6 = vector.broadcast %cst_5 : f32 to vector<8x128xf32>
    %7 = arith.maximumf %5, %6 : vector<8x128xf32>
    %c0_6 = arith.constant 0 : index
    %c0_7 = arith.constant 0 : index
    %8 = vector.load %arg4[%c0_6, %c0_7] : memref<128x128xf32, #tpu.memory_space<vmem>>, vector<128x128xf32>
    %cst_8 = arith.constant dense<0.000000e+00> : vector<8x128xf32>
    %9 = tpu.matmul %7, %8, %cst_8 {dimension_numbers = #tpu.dot_dimension_numbers<[1], [0], [0], [1], [0, 0, 1, 1], [], []>} : vector<8x128xf32>, vector<128x128xf32>, vector<8x128xf32> -> vector<8x128xf32>
    %c0_9 = arith.constant 0 : index
    %c0_10 = arith.constant 0 : index
    %10 = vector.load %arg5[%c0_9, %c0_10] : memref<1x128xf32, #tpu.memory_space<vmem>>, vector<1x128xf32>
    %11 = vector.broadcast %10 : vector<1x128xf32> to vector<8x128xf32>
    %12 = arith.addf %9, %11 : vector<8x128xf32>
    %c0_11 = arith.constant 0 : index
    %c0_12 = arith.constant 0 : index
    %13 = vector.load %arg6[%c0_11, %c0_12] : memref<8x128xf32, #tpu.memory_space<vmem>>, vector<8x128xf32>
    tpu.vector_store %arg6[%c0_11, %c0_12], %12 {strides = array<i32>} : memref<8x128xf32, #tpu.memory_space<vmem>>, vector<8x128xf32>,
    return
  }
  func.func @transform_0(%arg0: i32) -> (i32, i32) {
    %c0_i32 = arith.constant 0 : i32
    %c0_i32_0 = arith.constant 0 : i32
    return %arg0, %c0_i32 : i32, i32
  }
  func.func @transform_1(%arg0: i32) -> (i32, i32) {
    %c0_i32 = arith.constant 0 : i32
    %c0_i32_0 = arith.constant 0 : i32
    %c0_i32_1 = arith.constant 0 : i32
    return %c0_i32, %c0_i32_0 : i32, i32
  }
  func.func @transform_2(%arg0: i32) -> (i32, i32) {
    %c0_i32 = arith.constant 0 : i32
    %c0_i32_0 = arith.constant 0 : i32
    %c0_i32_1 = arith.constant 0 : i32
    return %c0_i32, %c0_i32_0 : i32, i32
  }
  func.func @transform_3(%arg0: i32) -> (i32, i32) {
    %c0_i32 = arith.constant 0 : i32
    %c0_i32_0 = arith.constant 0 : i32
    %c0_i32_1 = arith.constant 0 : i32
    return %c0_i32, %c0_i32_0 : i32, i32
  }
  func.func @transform_4(%arg0: i32) -> (i32, i32) {
    %c0_i32 = arith.constant 0 : i32
    %c0_i32_0 = arith.constant 0 : i32
    %c0_i32_1 = arith.constant 0 : i32
    return %c0_i32, %c0_i32_0 : i32, i32
  }
  func.func @transform_5(%arg0: i32) -> (i32, i32) {
    %c0_i32 = arith.constant 0 : i32
    %c0_i32_0 = arith.constant 0 : i32
    return %arg0, %c0_i32 : i32, i32
  }
}

</mosaic_0001>

<llo_original>
// kernel: neuralnet_forward.1
$region0: #{neuralnet_forward.1}
  #allocation0 [shape = 'u32[]', space=smem, size = 0x4, offset = 0x4, fixed_abs, tag = 'smem constant byte address 0x4 - core index']
  #allocation1 [shape = 'u32[72,128]{1,0:T(1,128)}', space=vmem, size = 0x9000, scoped, tag = 'internal scratch']
  %s0 = inlined_call_operand.vmem [shape: f32[8,128], index: 0, kind: input, shape index: {}]
  %s1 = inlined_call_operand.vmem [shape: f32[128,128], index: 1, kind: input, shape index: {}]
  %s2 = inlined_call_operand.vmem [shape: f32[1,128], index: 2, kind: input, shape index: {}]
  %s3 = inlined_call_operand.vmem [shape: f32[128,128], index: 3, kind: input, shape index: {}]
  %s4 = inlined_call_operand.vmem [shape: f32[1,128], index: 4, kind: input, shape index: {}]
  %s5 = inlined_call_operand.vmem [shape: f32[8,128], index: 5, kind: output, shape index: {}]
  %s6 = sld [smem:[#allocation0]]
  $region30: #{neuralnet_forward.1} parent=0
    _
  %s8 = ssub.s32 1, %s6
  %s9 = scalar_select 0, %s8, %s6
  // Predicated region
  $region2: #{neuralnet_forward.1} parent=0 // pred_check
    _
  $region3: #{neuralnet_forward.1} parent=0 // pred_check_branch
    %11 = sbr.rel (0) target = $region5
  $region4: #{neuralnet_forward.1} parent=0 // pred_region
    _
  $region5: #{neuralnet_forward.1} parent=0 // pred_fallthru
    _
  // Predicated region
  $region6: #{neuralnet_forward.1} parent=0 // pred_check
    _
  $region7: #{neuralnet_forward.1} parent=0 // pred_check_branch
    %13 = sbr.rel (0) target = $region9
  $region8: #{neuralnet_forward.1} parent=0 // pred_region
    _
  $region9: #{neuralnet_forward.1} parent=0 // pred_fallthru
    _
  // Predicated region
  $region10: #{neuralnet_forward.1} parent=0 // pred_check
    _
  $region11: #{neuralnet_forward.1} parent=0 // pred_check_branch
    %15 = sbr.rel (0) target = $region13
  $region12: #{neuralnet_forward.1} parent=0 // pred_region
    _
  $region13: #{neuralnet_forward.1} parent=0 // pred_fallthru
    _
  // Predicated region
  $region14: #{neuralnet_forward.1} parent=0 // pred_check
    _
  $region15: #{neuralnet_forward.1} parent=0 // pred_check_branch
    %17 = sbr.rel (0) target = $region17
  $region16: #{neuralnet_forward.1} parent=0 // pred_region
    _
  $region17: #{neuralnet_forward.1} parent=0 // pred_fallthru
    _
  // Predicated region
  $region18: #{neuralnet_forward.1} parent=0 // pred_check
    _
  $region19: #{neuralnet_forward.1} parent=0 // pred_check_branch
    %19 = sbr.rel (0) target = $region21
  $region20: #{neuralnet_forward.1} parent=0 // pred_region
    _
  $region21: #{neuralnet_forward.1} parent=0 // pred_fallthru
    _
  %v20 = vld [vmem:[%s0] sm:$0xff]
  %v21 = vld [vmem:[%s1] sm:$0xff]
  %v22 = vld [vmem:[%s1 + $0x8] sm:$0xff]
  %v23 = vld [vmem:[%s1 + $0x10] sm:$0xff]
  %v24 = vld [vmem:[%s1 + $0x18] sm:$0xff]
  %v25 = vld [vmem:[%s1 + $0x20] sm:$0xff]
  %v26 = vld [vmem:[%s1 + $0x28] sm:$0xff]
  %v27 = vld [vmem:[%s1 + $0x30] sm:$0xff]
  %v28 = vld [vmem:[%s1 + $0x38] sm:$0xff]
  %v29 = vld [vmem:[%s1 + $0x40] sm:$0xff]
  %v30 = vld [vmem:[%s1 + $0x48] sm:$0xff]
  %v31 = vld [vmem:[%s1 + $0x50] sm:$0xff]
  %v32 = vld [vmem:[%s1 + $0x58] sm:$0xff]
  %v33 = vld [vmem:[%s1 + $0x60] sm:$0xff]
  %v34 = vld [vmem:[%s1 + $0x68] sm:$0xff]
  %v35 = vld [vmem:[%s1 + $0x70] sm:$0xff]
  %v36 = vld [vmem:[%s1 + $0x78] sm:$0xff]
  %v37 = vld [vmem:[%s2] sm:$0x1]
  %v39 = vperm.slane %v37, 0
  %41 = vmatpush.msra.mxu0 %v36
  %42 = vmatpush.msra.mxu0 %v35
  %43 = vmatpush.msra.mxu0 %v34
  %44 = vmatpush.msra.mxu0 %v33
  %45 = vmatpush.msra.mxu0 %v32
  %46 = vmatpush.msra.mxu0 %v31
  %47 = vmatpush.msra.mxu0 %v30
  %48 = vmatpush.msra.mxu0 %v29
  %49 = vmatpush.msra.mxu0 %v28
  %50 = vmatpush.msra.mxu0 %v27
  %51 = vmatpush.msra.mxu0 %v26
  %52 = vmatpush.msra.mxu0 %v25
  %53 = vmatpush.msra.mxu0 %v24
  %54 = vmatpush.msra.mxu0 %v23
  %55 = vmatpush.msra.mxu0 %v22
  %56 = vmatpush.msra.mxu0 %v21
  %57 = vmatmul.f32.gmra.mxu0 %v20
  %v58 = vpop.f32.mrf.mxu0
  %v59 = vadd.f32 %v39, %v58
  %60 = vdwg.mxu0
  %v61 = vmax.f32 %v59, 0.0
  %v62 = vld [vmem:[%s3] sm:$0xff]
  %v63 = vld [vmem:[%s3 + $0x8] sm:$0xff]
  %v64 = vld [vmem:[%s3 + $0x10] sm:$0xff]
  %v65 = vld [vmem:[%s3 + $0x18] sm:$0xff]
  %v66 = vld [vmem:[%s3 + $0x20] sm:$0xff]
  %v67 = vld [vmem:[%s3 + $0x28] sm:$0xff]
  %v68 = vld [vmem:[%s3 + $0x30] sm:$0xff]
  %v69 = vld [vmem:[%s3 + $0x38] sm:$0xff]
  %v70 = vld [vmem:[%s3 + $0x40] sm:$0xff]
  %v71 = vld [vmem:[%s3 + $0x48] sm:$0xff]
  %v72 = vld [vmem:[%s3 + $0x50] sm:$0xff]
  %v73 = vld [vmem:[%s3 + $0x58] sm:$0xff]
  %v74 = vld [vmem:[%s3 + $0x60] sm:$0xff]
  %v75 = vld [vmem:[%s3 + $0x68] sm:$0xff]
  %v76 = vld [vmem:[%s3 + $0x70] sm:$0xff]
  %v77 = vld [vmem:[%s3 + $0x78] sm:$0xff]
  %v78 = vld [vmem:[%s4] sm:$0x1]
  %v80 = vperm.slane %v78, 0
  %82 = vmatpush.msra.mxu0 %v77
  %83 = vmatpush.msra.mxu0 %v76
  %84 = vmatpush.msra.mxu0 %v75
  %85 = vmatpush.msra.mxu0 %v74
  %86 = vmatpush.msra.mxu0 %v73
  %87 = vmatpush.msra.mxu0 %v72
  %88 = vmatpush.msra.mxu0 %v71
  %89 = vmatpush.msra.mxu0 %v70
  %90 = vmatpush.msra.mxu0 %v69
  %91 = vmatpush.msra.mxu0 %v68
  %92 = vmatpush.msra.mxu0 %v67
  %93 = vmatpush.msra.mxu0 %v66
  %94 = vmatpush.msra.mxu0 %v65
  %95 = vmatpush.msra.mxu0 %v64
  %96 = vmatpush.msra.mxu0 %v63
  %97 = vmatpush.msra.mxu0 %v62
  %98 = vmatmul.f32.gmra.mxu0 %v61
  %v99 = vpop.f32.mrf.mxu0
  %v100 = vadd.f32 %v80, %v99
  %101 = vdwg.mxu0
  %102 = vst [vmem:[%s5] sm:$0xff] %v100
  // Predicated region
  $region22: #{neuralnet_forward.1} parent=0 // pred_check
    _
  $region23: #{neuralnet_forward.1} parent=0 // pred_check_branch
    %104 = sbr.rel (0) target = $region25
  $region24: #{neuralnet_forward.1} parent=0 // pred_region
    _
  $region25: #{neuralnet_forward.1} parent=0 // pred_fallthru
    _
  // Predicated region
  $region26: #{neuralnet_forward.1} parent=0 // pred_check
    _
  $region27: #{neuralnet_forward.1} parent=0 // pred_check_branch
    %106 = sbr.rel (0) target = $region29
  $region28: #{neuralnet_forward.1} parent=0 // pred_region
    _
  $region29: #{neuralnet_forward.1} parent=0 // pred_fallthru
    _

</llo_original>
